<compile_context>
chip_gen: v7x
topology: tpu7x:2x2x1
jax: 0.10.0
libtpu: 0.0.40
codegen_flags: <defaults>
</compile_context>

<pallas_src>
import jax
import jax.numpy as jnp
from jax.experimental import pallas as pl
from jax.experimental.pallas import tpu as pltpu


def _round_up(x, m):
    return (x + m - 1) // m * m


def _pick_chunk(total, candidates=(1024, 512, 256, 128)):
    """Largest H-chunk (multiple of 128) that evenly divides the fused hidden dim."""
    for c in candidates:
        if c <= total and total % c == 0:
            return c
    return total


def _vmem_estimate_bytes(tile_b, Dp, tile_h, Np):
    """Rough per-kernel VMEM footprint (sublane-padded biases, double buffers)."""
    x_b = 2 * tile_b * Dp * 2        # bf16 activation tile, double-buffered
    w1_b = 2 * Dp * tile_h * 2       # bf16 W1 chunk, double-buffered
    b1_b = 2 * 8 * tile_h * 4        # f32 b1 chunk (sublane-padded), double-buffered
    w2_b = 2 * tile_h * Np * 2       # bf16 W2 chunk, double-buffered
    b2_b = 1 * 8 * Np * 4            # f32 b2, single-buffered (pl.Buffered(1))
    out_b = 2 * tile_b * Np * 4      # f32 output tile, double-buffered
    acc_b = tile_b * Np * 4          # f32 accumulator scratch
    return x_b + w1_b + b1_b + w2_b + b2_b + out_b + acc_b


# ----------------------------------------------------------------------------
# Fused kernel (H-chunked accumulation):
#   acc += relu(x @ W1[:, hk] + b1[hk]) @ W2[hk, :]   ;   o = acc + b2
# ----------------------------------------------------------------------------
def _fused_decoder_kernel(x_ref, w1_ref, b1_ref, w2_ref, b2_ref, o_ref, acc_ref):
    k = pl.program_id(1)

    @pl.when(k == 0)
    def _init():
        acc_ref[...] = jnp.zeros_like(acc_ref)

    x = x_ref[...]                                                    # bf16 [TB, Dp]
    h = jnp.dot(x, w1_ref[...], preferred_element_type=jnp.float32)  # f32  [TB, TH]
    h = jnp.maximum(h + b1_ref[...], 0.0).astype(jnp.bfloat16)       # bias+ReLU, bf16 for MXU
    acc_ref[...] += jnp.dot(h, w2_ref[...],
                            preferred_element_type=jnp.float32)      # f32  [TB, Np]

    @pl.when(k == pl.num_programs(1) - 1)
    def _finalize():
        o_ref[...] = (acc_ref[...] + b2_ref[...]).astype(o_ref.dtype)


# ----------------------------------------------------------------------------
# Parameter construction (matches the module's __init__ shapes)
# ----------------------------------------------------------------------------
def init_linear(key, d_in, d_out, scale=0.02):
    kw, kb = jax.random.split(key)
    w = scale * jax.random.normal(kw, (d_in, d_out), dtype=jnp.float32)
    b = scale * jax.random.normal(kb, (1, d_out), dtype=jnp.float32)
    return w, b


def build_decoder_params(key, d_model, dim_ff, action_space_config):
    """Deterministic synthetic parameters; weights stored [in, out] (x @ W + b)."""
    params = {}
    n_low = len(action_space_config["low_level"])
    keys = jax.random.split(key, 4 + 2 * n_low)

    params["high_level"] = (
        *init_linear(keys[0], d_model, dim_ff),
        *init_linear(keys[1], dim_ff, action_space_config["high_level"]),
    )

    params["low_level"] = {}
    for i, (action_type, action_dim) in enumerate(
            action_space_config["low_level"].items()):
        params["low_level"][action_type] = (
            *init_linear(keys[2 + 2 * i], d_model, dim_ff // 2),
            *init_linear(keys[3 + 2 * i], dim_ff // 2, action_dim),
        )

    params["value"] = (
        *init_linear(keys[2 + 2 * n_low], d_model, dim_ff // 2),
        *init_linear(keys[3 + 2 * n_low], dim_ff // 2, 1),
    )
    return params


# ----------------------------------------------------------------------------
# One-time fusion of all heads into padded (bf16) weight slabs.
# ----------------------------------------------------------------------------
def fuse_decoder_params(params, d_model):
    heads = [("high_level", params["high_level"])]
    heads += [(("low_level", k), p) for k, p in params["low_level"].items()]
    heads += [("value", params["value"])]

    hidden_dims = [p[0].shape[1] for _, p in heads]
    out_dims = [p[2].shape[1] for _, p in heads]

    Dp = _round_up(d_model, 128)           # contraction dim, padded to lanes
    Hp = _round_up(sum(hidden_dims), 128)  # fused hidden dim
    Np = _round_up(sum(out_dims), 128)     # lane-dense fused output dim

    w1 = jnp.zeros((Dp, Hp), jnp.float32)
    b1 = jnp.zeros((1, Hp), jnp.float32)
    w2 = jnp.zeros((Hp, Np), jnp.float32)   # block-diagonal (zero off-blocks => no cross-talk)
    b2 = jnp.zeros((1, Np), jnp.float32)

    slices = []
    h_off, o_off = 0, 0
    for name, (pw1, pb1, pw2, pb2) in heads:
        h, o = pw1.shape[1], pw2.shape[1]
        w1 = w1.at[:d_model, h_off:h_off + h].set(pw1)
        b1 = b1.at[:, h_off:h_off + h].set(pb1)
        w2 = w2.at[h_off:h_off + h, o_off:o_off + o].set(pw2)
        b2 = b2.at[:, o_off:o_off + o].set(pb2)
        slices.append((name, o_off, o))
        h_off += h
        o_off += o

    # TODO(synk): optional fp8 (v7x) / int8 (v6e) weight storage with per-head scales
    # folded into b1/b2 would halve resident weight bytes; kept bf16 for portability.
    return {
        "w1": w1.astype(jnp.bfloat16),
        "b1": b1,                       # biases stay f32
        "w2": w2.astype(jnp.bfloat16),
        "b2": b2,
        "d_model": d_model,
        "Dp": Dp, "Hp": Hp, "Np": Np,
        "slices": slices,
    }


# ----------------------------------------------------------------------------
# Forward pass (eval mode): one pallas_call for the whole decoder.
# ----------------------------------------------------------------------------
def hierarchical_action_decoder(features, fused, *, tile_b=None, tile_h=None):
    B, d_model = features.shape
    assert d_model == fused["d_model"]
    Dp, Hp, Np = fused["Dp"], fused["Hp"], fused["Np"]

    # --- batch tiling: aim for >=2 tiles so v7x can shard the parallel axis
    #     across both TensorCores; cap tile at 256 rows (sweepable via tile_b=).
    B8 = _round_up(B, 8)
    if tile_b is None:
        tile_b = min(256, _round_up(max((B8 + 1) // 2, 8), 8))
    Bp = _round_up(B8, tile_b)

    # --- hidden chunking: 512-1024-wide chunks keep the live intermediate small.
    if tile_h is None:
        tile_h = _pick_chunk(Hp)
    n_h = Hp // tile_h

    # --- input: skip the materialized pad/cast pass when already aligned.
    x = features.astype(jnp.bfloat16)
    if (Bp, Dp) != (B, d_model):
        x = jnp.pad(x, ((0, Bp - B), (0, Dp - d_model)))

    est = _vmem_estimate_bytes(tile_b, Dp, tile_h, Np)
    vmem_limit = int(min(64 * 2**20, max(32 * 2**20, 2 * est + (8 << 20))))

    out = pl.pallas_call(
        _fused_decoder_kernel,
        out_shape=jax.ShapeDtypeStruct((Bp, Np), jnp.float32),
        grid=(Bp // tile_b, n_h),                              # reduction axis last
        in_specs=[
            pl.BlockSpec((tile_b, Dp), lambda i, k: (i, 0)),   # activations (constant over k)
            pl.BlockSpec((Dp, tile_h), lambda i, k: (0, k)),   # W1 column chunk (streamed)
            pl.BlockSpec((1, tile_h), lambda i, k: (0, k)),    # b1 chunk
            pl.BlockSpec((tile_h, Np), lambda i, k: (k, 0)),   # W2 row chunk (block-diag)
            pl.BlockSpec((1, Np), lambda i, k: (0, 0),
                         pipeline_mode=pl.Buffered(1)),        # b2: constant -> single buffer
        ],
        out_specs=pl.BlockSpec((tile_b, Np), lambda i, k: (i, 0)),   # lane-dense slab
        scratch_shapes=[pltpu.VMEM((tile_b, Np), jnp.float32)],      # f32 accumulator
        compiler_params=pltpu.CompilerParams(
            dimension_semantics=("parallel", "arbitrary"),
            vmem_limit_bytes=vmem_limit),
    )(x, fused["w1"], fused["b1"], fused["w2"], fused["b2"])

    out = out[:B]  # drop batch padding

    # Slice per-head logits out of the lane-dense slab (drops lane padding too).
    results = {"low_level_logits": {}}
    for name, off, width in fused["slices"]:
        chunk = out[:, off:off + width]
        if name == "high_level":
            results["high_level_logits"] = chunk
        elif name == "value":
            results["value"] = chunk
        else:
            results["low_level_logits"][name[1]] = chunk
    return results


# ----------------------------------------------------------------------------
# Pure-JAX reference (same bf16-matmul / f32-accumulate numerics as the kernel).
# ----------------------------------------------------------------------------
def _ref_mlp2(x, w1, b1, w2, b2):
    xb = x.astype(jnp.bfloat16)
    h = jnp.dot(xb, w1.astype(jnp.bfloat16),
                preferred_element_type=jnp.float32) + b1
    h = jnp.maximum(h, 0.0).astype(jnp.bfloat16)
    return jnp.dot(h, w2.astype(jnp.bfloat16),
                   preferred_element_type=jnp.float32) + b2


if __name__ == "__main__":
    # Small config consistent with the module (scaled down from 512/2048).
    d_model = 32
    dim_ff = 64
    batch = 2
    action_space_config = {
        "high_level": 8,
        "low_level": {"move": 4, "attack": 6},
    }

    key = jax.random.PRNGKey(0)
    k_feat, k_params = jax.random.split(key)

    features = jax.random.normal(k_feat, (batch, d_model), dtype=jnp.float32)
    params = build_decoder_params(k_params, d_model, dim_ff, action_space_config)
    fused = fuse_decoder_params(params, d_model)

    out = hierarchical_action_decoder(features, fused)
    out = jax.block_until_ready(out)

    # Sanity check against the pure-JAX reference (same bf16 matmul numerics).
    ref_high = _ref_mlp2(features, *params["high_level"])
    assert jnp.allclose(out["high_level_logits"], ref_high, atol=1e-4, rtol=1e-4)
    ref_val = _ref_mlp2(features, *params["value"])
    assert jnp.allclose(out["value"], ref_val, atol=1e-4, rtol=1e-4)
    for atype, p in params["low_level"].items():
        ref_ll = _ref_mlp2(features, *p)
        assert jnp.allclose(out["low_level_logits"][atype], ref_ll,
                            atol=1e-4, rtol=1e-4)
    assert out["high_level_logits"].shape == (batch, action_space_config["high_level"])
    assert out["value"].shape == (batch, 1)
    for atype, adim in action_space_config["low_level"].items():
        assert out["low_level_logits"][atype].shape == (batch, adim)

    # TODO(synk): nn.Dropout in train mode (stochastic masking) is not implemented;
    # eval-mode (identity) semantics are reproduced.
    print("KERNEL_OK")
</pallas_src>

<mosaic_0001>
module attributes {stable_mosaic.version = 11 : i64} {
  func.func @_fused_decoder_kernel(%arg0: i32, %arg1: i32, %arg2: memref<8x128xbf16, #tpu.memory_space<vmem>>, %arg3: memref<128x256xbf16, #tpu.memory_space<vmem>>, %arg4: memref<1x256xf32, #tpu.memory_space<vmem>>, %arg5: memref<256x128xbf16, #tpu.memory_space<vmem>>, %arg6: memref<1x128xf32, #tpu.memory_space<vmem>>, %arg7: memref<8x128xf32, #tpu.memory_space<vmem>>, %arg8: memref<8x128xf32, #tpu.memory_space<vmem>>) attributes {dimension_semantics = [#tpu.dimension_semantics<parallel>, #tpu.dimension_semantics<arbitrary>], iteration_bounds = array<i64: 1, 1>, scalar_prefetch = 0 : i64, scratch_operands = 1 : i64, tpu.core_type = #tpu.core_type<tc>, window_params = [{transform_indices = @transform_0, window_bounds = array<i64: 8, 128>}, {transform_indices = @transform_1, window_bounds = array<i64: 128, 256>}, {transform_indices = @transform_2, window_bounds = array<i64: 1, 256>}, {transform_indices = @transform_3, window_bounds = array<i64: 256, 128>}, {pipeline_mode = #tpu.pipeline_mode<synchronous>, transform_indices = @transform_4, window_bounds = array<i64: 1, 128>}, {transform_indices = @transform_5, window_bounds = array<i64: 8, 128>}]} {
    %c0_i32 = arith.constant 0 : i32
    %0 = arith.cmpi eq, %arg1, %c0_i32 : i32
    %1 = arith.extui %0 : i1 to i32
    %c0_i32_0 = arith.constant 0 : i32
    %2 = arith.cmpi ne, %1, %c0_i32_0 : i32
    scf.if %2 {
      %cst_16 = arith.constant 0.000000e+00 : f32
      %20 = vector.broadcast %cst_16 : f32 to vector<8x128xf32>
      %c0_17 = arith.constant 0 : index
      %c0_18 = arith.constant 0 : index
      %21 = vector.load %arg8[%c0_17, %c0_18] : memref<8x128xf32, #tpu.memory_space<vmem>>, vector<8x128xf32>
      tpu.vector_store %arg8[%c0_17, %c0_18], %20 {strides = array<i32>} : memref<8x128xf32, #tpu.memory_space<vmem>>, vector<8x128xf32>,
    } else {
    }
    %c0 = arith.constant 0 : index
    %c0_1 = arith.constant 0 : index
    %3 = vector.load %arg2[%c0, %c0_1] : memref<8x128xbf16, #tpu.memory_space<vmem>>, vector<8x128xbf16>
    %c0_2 = arith.constant 0 : index
    %c0_3 = arith.constant 0 : index
    %4 = vector.load %arg3[%c0_2, %c0_3] : memref<128x256xbf16, #tpu.memory_space<vmem>>, vector<128x256xbf16>
    %cst = arith.constant dense<0.000000e+00> : vector<8x256xf32>
    %5 = tpu.matmul %3, %4, %cst {dimension_numbers = #tpu.dot_dimension_numbers<[1], [0], [0], [1], [0, 0, 1, 1], [], []>} : vector<8x128xbf16>, vector<128x256xbf16>, vector<8x256xf32> -> vector<8x256xf32>
    %c0_4 = arith.constant 0 : index
    %c0_5 = arith.constant 0 : index
    %6 = vector.load %arg4[%c0_4, %c0_5] : memref<1x256xf32, #tpu.memory_space<vmem>>, vector<1x256xf32>
    %7 = vector.broadcast %6 : vector<1x256xf32> to vector<8x256xf32>
    %8 = arith.addf %5, %7 : vector<8x256xf32>
    %cst_6 = arith.constant 0.000000e+00 : f32
    %9 = vector.broadcast %cst_6 : f32 to vector<8x256xf32>
    %10 = arith.maximumf %8, %9 : vector<8x256xf32>
    %11 = arith.truncf %10 : vector<8x256xf32> to vector<8x256xbf16>
    %c0_7 = arith.constant 0 : index
    %c0_8 = arith.constant 0 : index
    %12 = vector.load %arg8[%c0_7, %c0_8] : memref<8x128xf32, #tpu.memory_space<vmem>>, vector<8x128xf32>
    %c0_9 = arith.constant 0 : index
    %c0_10 = arith.constant 0 : index
    %13 = vector.load %arg5[%c0_9, %c0_10] : memref<256x128xbf16, #tpu.memory_space<vmem>>, vector<256x128xbf16>
    %cst_11 = arith.constant dense<0.000000e+00> : vector<8x128xf32>
    %14 = tpu.matmul %11, %13, %cst_11 {dimension_numbers = #tpu.dot_dimension_numbers<[1], [0], [0], [1], [0, 0, 1, 1], [], []>} : vector<8x256xbf16>, vector<256x128xbf16>, vector<8x128xf32> -> vector<8x128xf32>
    %15 = arith.addf %12, %14 : vector<8x128xf32>
    %c0_12 = arith.constant 0 : index
    %c0_13 = arith.constant 0 : index
    %16 = vector.load %arg8[%c0_12, %c0_13] : memref<8x128xf32, #tpu.memory_space<vmem>>, vector<8x128xf32>
    tpu.vector_store %arg8[%c0_12, %c0_13], %15 {strides = array<i32>} : memref<8x128xf32, #tpu.memory_space<vmem>>, vector<8x128xf32>,
    %c0_i32_14 = arith.constant 0 : i32
    %17 = arith.cmpi eq, %arg1, %c0_i32_14 : i32
    %18 = arith.extui %17 : i1 to i32
    %c0_i32_15 = arith.constant 0 : i32
    %19 = arith.cmpi ne, %18, %c0_i32_15 : i32
    scf.if %19 {
      %c0_16 = arith.constant 0 : index
      %c0_17 = arith.constant 0 : index
      %20 = vector.load %arg8[%c0_16, %c0_17] : memref<8x128xf32, #tpu.memory_space<vmem>>, vector<8x128xf32>
      %c0_18 = arith.constant 0 : index
      %c0_19 = arith.constant 0 : index
      %21 = vector.load %arg6[%c0_18, %c0_19] : memref<1x128xf32, #tpu.memory_space<vmem>>, vector<1x128xf32>
      %22 = vector.broadcast %21 : vector<1x128xf32> to vector<8x128xf32>
      %23 = arith.addf %20, %22 : vector<8x128xf32>
      %c0_20 = arith.constant 0 : index
      %c0_21 = arith.constant 0 : index
      %24 = vector.load %arg7[%c0_20, %c0_21] : memref<8x128xf32, #tpu.memory_space<vmem>>, vector<8x128xf32>
      tpu.vector_store %arg7[%c0_20, %c0_21], %23 {strides = array<i32>} : memref<8x128xf32, #tpu.memory_space<vmem>>, vector<8x128xf32>,
    } else {
    }
    return
  }
  func.func @transform_0(%arg0: i32, %arg1: i32) -> (i32, i32) {
    %c0_i32 = arith.constant 0 : i32
    %c0_i32_0 = arith.constant 0 : i32
    return %arg0, %c0_i32 : i32, i32
  }
  func.func @transform_1(%arg0: i32, %arg1: i32) -> (i32, i32) {
    %c0_i32 = arith.constant 0 : i32
    %c0_i32_0 = arith.constant 0 : i32
    return %c0_i32, %arg1 : i32, i32
  }
  func.func @transform_2(%arg0: i32, %arg1: i32) -> (i32, i32) {
    %c0_i32 = arith.constant 0 : i32
    %c0_i32_0 = arith.constant 0 : i32
    return %c0_i32, %arg1 : i32, i32
  }
  func.func @transform_3(%arg0: i32, %arg1: i32) -> (i32, i32) {
    %c0_i32 = arith.constant 0 : i32
    %c0_i32_0 = arith.constant 0 : i32
    return %arg1, %c0_i32 : i32, i32
  }
  func.func @transform_4(%arg0: i32, %arg1: i32) -> (i32, i32) {
    %c0_i32 = arith.constant 0 : i32
    %c0_i32_0 = arith.constant 0 : i32
    %c0_i32_1 = arith.constant 0 : i32
    return %c0_i32, %c0_i32_0 : i32, i32
  }
  func.func @transform_5(%arg0: i32, %arg1: i32) -> (i32, i32) {
    %c0_i32 = arith.constant 0 : i32
    %c0_i32_0 = arith.constant 0 : i32
    return %arg0, %c0_i32 : i32, i32
  }
}

</mosaic_0001>

<llo_original>
// kernel: tpu_custom_call.1
$region0: #{tpu_custom_call.1}
  #allocation0 [shape = 'u32[]', space=smem, size = 0x4, offset = 0x4, fixed_abs, tag = 'smem constant byte address 0x4 - core index']
  #allocation1 [shape = 'u32[144,128]{1,0:T(1,128)}', space=vmem, size = 0x12000, scoped, tag = 'internal scratch']
  #allocation2 [shape = 'f32[8,128]{1,0:T(8,128)}', space=vmem, size = 0x1000, scoped, tag = 'scratch operand']
  %s0 = inlined_call_operand.hbm [shape: bf16[8,128], index: 0, kind: input, shape index: {}]
  %s1 = inlined_call_operand.hbm [shape: bf16[128,256], index: 1, kind: input, shape index: {}]
  %s2 = inlined_call_operand.vmem [shape: f32[1,256], index: 2, kind: input, shape index: {}]
  %s3 = inlined_call_operand.hbm [shape: bf16[256,128], index: 3, kind: input, shape index: {}]
  %s4 = inlined_call_operand.vmem [shape: f32[1,128], index: 4, kind: input, shape index: {}]
  %s5 = inlined_call_operand.hbm [shape: f32[8,128], index: 5, kind: output, shape index: {}]
  %s6 = sld [smem:[#allocation0]]
  $region50: #{tpu_custom_call.1} parent=0
    _
  %s8 = ssub.s32 1, %s6
  %s9 = scalar_select 0, %s8, %s6
  $region1: #{tpu_custom_call.1} parent=0
    #allocation3 [shape = 'u8[2048]{0}', space=vmem, size = 0x800, scoped, tag = 'input window, operand 0, single buffered']
    #allocation4 [shape = 's32[1]{0}', space=sflag, size = 0x4, scoped, tag = 'scoped memory for tpu_custom_call.1']
    #allocation5 [shape = 's32[1]{0}', space=sflag, size = 0x4, scoped, tag = 'scoped memory for tpu_custom_call.1']
    #allocation6 [shape = 'u8[65536]{0}', space=vmem, size = 0x10000, scoped, tag = 'input window, operand 1, single buffered']
    #allocation7 [shape = 's32[1]{0}', space=sflag, size = 0x4, scoped, tag = 'scoped memory for tpu_custom_call.1']
    #allocation8 [shape = 'u8[65536]{0}', space=vmem, size = 0x10000, scoped, tag = 'input window, operand 3, single buffered']
    #allocation9 [shape = 'u8[4096]{0}', space=vmem, size = 0x1000, scoped, tag = 'output window, operand 0, single buffered']
    %10 = vsyncpa [#allocation4], 0
    %11 = vsyncpa [#allocation7], 0
    %12 = vsyncpa [#allocation5], 0
    // Predicated region
    $region2: #{tpu_custom_call.1} parent=1 // pred_check
      _
    $region3: #{tpu_custom_call.1} parent=1 // pred_check_branch
      %14 = sbr.rel (0) target = $region5
    $region4: #{tpu_custom_call.1} parent=1 // pred_region
      %s16 = ssub.s32 64, 64
      %17 = vsyncadd [#allocation4], %s16
      %s19 = sshll.u32 [#allocation3], 4
      %s20 = int_to_ptr.vmem [resolvable:$true] %s19
      %22 = dma.hbm_to_vmem [thread:$0]  %s0, 64, %s20, [#allocation4]
    $region5: #{tpu_custom_call.1} parent=1 // pred_fallthru
      _
    // Predicated region
    $region6: #{tpu_custom_call.1} parent=1 // pred_check
      _
    $region7: #{tpu_custom_call.1} parent=1 // pred_check_branch
      %24 = sbr.rel (0) target = $region9
    $region8: #{tpu_custom_call.1} parent=1 // pred_region
      %s26 = ssub.s32 2048, 2048
      %27 = vsyncadd [#allocation7], %s26
      %s28 = sshll.u32 [#allocation6], 4
      %s29 = int_to_ptr.vmem [resolvable:$true] %s28
      %34 = dma.hbm_to_vmem [thread:$0]  %s1, 2048, %s29, [#allocation7], 128, 128, 8
    $region9: #{tpu_custom_call.1} parent=1 // pred_fallthru
      _
    // Predicated region
    $region10: #{tpu_custom_call.1} parent=1 // pred_check
      _
    $region11: #{tpu_custom_call.1} parent=1 // pred_check_branch
      %36 = sbr.rel (0) target = $region13
    $region12: #{tpu_custom_call.1} parent=1 // pred_region
      _
    $region13: #{tpu_custom_call.1} parent=1 // pred_fallthru
      _
    // Predicated region
    $region14: #{tpu_custom_call.1} parent=1 // pred_check
      _
    $region15: #{tpu_custom_call.1} parent=1 // pred_check_branch
      %38 = sbr.rel (0) target = $region17
    $region16: #{tpu_custom_call.1} parent=1 // pred_region
      %s40 = ssub.s32 2048, 2048
      %41 = vsyncadd [#allocation7], %s40
      %s42 = sshll.u32 [#allocation8], 4
      %s43 = int_to_ptr.vmem [resolvable:$true] %s42
      %48 = dma.hbm_to_vmem [thread:$0]  %s3, 2048, %s43, [#allocation7], 64, 64, 4
    $region17: #{tpu_custom_call.1} parent=1 // pred_fallthru
      _
    // Predicated region
    $region18: #{tpu_custom_call.1} parent=1 // pred_check
      _
    $region19: #{tpu_custom_call.1} parent=1 // pred_check_branch
      %50 = sbr.rel (0) target = $region21
    $region20: #{tpu_custom_call.1} parent=1 // pred_region
      _
    $region21: #{tpu_custom_call.1} parent=1 // pred_fallthru
      _
    // Predicated region
    $region22: #{tpu_custom_call.1} parent=1 // pred_check
      _
    $region23: #{tpu_custom_call.1} parent=1 // pred_check_branch
      %52 = sbr.rel (0) target = $region25
    $region24: #{tpu_custom_call.1} parent=1 // pred_region
      %53 = dma.done [#allocation4], 64
    $region25: #{tpu_custom_call.1} parent=1 // pred_fallthru
      _
    // Predicated region
    $region26: #{tpu_custom_call.1} parent=1 // pred_check
      _
    $region27: #{tpu_custom_call.1} parent=1 // pred_check_branch
      %55 = sbr.rel (0) target = $region29
    $region28: #{tpu_custom_call.1} parent=1 // pred_region
      %56 = dma.done [#allocation7], 2048
    $region29: #{tpu_custom_call.1} parent=1 // pred_fallthru
      _
    // Predicated region
    $region30: #{tpu_custom_call.1} parent=1 // pred_check
      _
    $region31: #{tpu_custom_call.1} parent=1 // pred_check_branch
      %58 = sbr.rel (0) target = $region33
    $region32: #{tpu_custom_call.1} parent=1 // pred_region
      %59 = dma.done [#allocation7], 2048
    $region33: #{tpu_custom_call.1} parent=1 // pred_fallthru
      _
    %p61 = scmp.eq.s32.totalorder 0, 0
    // Predicated region
    $region34: #{tpu_custom_call.1} parent=1 // pred_check
      %p62 = pneg %p61
    $region35: #{tpu_custom_call.1} parent=1 // pred_check_branch
      %64 = sbr.rel (%p62) target = $region37
    $region36: #{tpu_custom_call.1} parent=1 // pred_region
      %65 = vst [vmem:[#allocation2] sm:$0xff] 0.0
    $region37: #{tpu_custom_call.1} parent=1 // pred_fallthru
      _
    %v66 = vld [vmem:[#allocation3] sm:$0xf]
    %v67 = vld [vmem:[#allocation6] sm:$0xff]
    %v68 = vld [vmem:[#allocation6 + $0x8] sm:$0xff]
    %v69 = vld [vmem:[#allocation6 + $0x10] sm:$0xff]
    %v70 = vld [vmem:[#allocation6 + $0x18] sm:$0xff]
    %v71 = vld [vmem:[#allocation6 + $0x20] sm:$0xff]
    %v72 = vld [vmem:[#allocation6 + $0x28] sm:$0xff]
    %v73 = vld [vmem:[#allocation6 + $0x30] sm:$0xff]
    %v74 = vld [vmem:[#allocation6 + $0x38] sm:$0xff]
    %v75 = vld [vmem:[#allocation6 + $0x40] sm:$0xff]
    %v76 = vld [vmem:[#allocation6 + $0x48] sm:$0xff]
    %v77 = vld [vmem:[#allocation6 + $0x50] sm:$0xff]
    %v78 = vld [vmem:[#allocation6 + $0x58] sm:$0xff]
    %v79 = vld [vmem:[#allocation6 + $0x60] sm:$0xff]
    %v80 = vld [vmem:[#allocation6 + $0x68] sm:$0xff]
    %v81 = vld [vmem:[#allocation6 + $0x70] sm:$0xff]
    %v82 = vld [vmem:[#allocation6 + $0x78] sm:$0xff]
    %v83 = vld [vmem:[%s2] sm:$0x3]
    %v85 = vlaneseq
    %v86 = vshrl.u32 %v85, 7
    %v87 = vsub.s32 0, %v86
    %v88 = vrot.slane %v83, %v87
    %v89 = vlaneseq
    %v90 = vshrl.u32 %v89, 7
    %v91 = vsub.s32 1, %v90
    %v92 = vrot.slane %v83, %v91
    %v111 = vunpack.c.l.b16 %v67
    %v112 = vunpack.c.h.b16 %v67
    %v113 = vunpack.c.l.b16 %v68
    %v114 = vunpack.c.h.b16 %v68
    %v115 = vunpack.c.l.b16 %v69
    %v116 = vunpack.c.h.b16 %v69
    %v117 = vunpack.c.l.b16 %v70
    %v118 = vunpack.c.h.b16 %v70
    %v119 = vunpack.c.l.b16 %v71
    %v120 = vunpack.c.h.b16 %v71
    %v121 = vunpack.c.l.b16 %v72
    %v122 = vunpack.c.h.b16 %v72
    %v123 = vunpack.c.l.b16 %v73
    %v124 = vunpack.c.h.b16 %v73
    %v125 = vunpack.c.l.b16 %v74
    %v126 = vunpack.c.h.b16 %v74
    %v127 = vunpack.c.l.b16 %v75
    %v128 = vunpack.c.h.b16 %v75
    %v129 = vunpack.c.l.b16 %v76
    %v130 = vunpack.c.h.b16 %v76
    %v131 = vunpack.c.l.b16 %v77
    %v132 = vunpack.c.h.b16 %v77
    %v133 = vunpack.c.l.b16 %v78
    %v134 = vunpack.c.h.b16 %v78
    %v135 = vunpack.c.l.b16 %v79
    %v136 = vunpack.c.h.b16 %v79
    %v137 = vunpack.c.l.b16 %v80
    %v138 = vunpack.c.h.b16 %v80
    %v139 = vunpack.c.l.b16 %v81
    %v140 = vunpack.c.h.b16 %v81
    %v141 = vunpack.c.l.b16 %v82
    %v142 = vunpack.c.h.b16 %v82
    %v143 = vpack.c.b16 %v113, %v111
    %v144 = vpack.c.b16 %v114, %v112
    %v145 = vpack.c.b16 %v117, %v115
    %v146 = vpack.c.b16 %v118, %v116
    %v147 = vpack.c.b16 %v121, %v119
    %v148 = vpack.c.b16 %v122, %v120
    %v149 = vpack.c.b16 %v125, %v123
    %v150 = vpack.c.b16 %v126, %v124
    %v151 = vpack.c.b16 %v129, %v127
    %v152 = vpack.c.b16 %v130, %v128
    %v153 = vpack.c.b16 %v133, %v131
    %v154 = vpack.c.b16 %v134, %v132
    %v155 = vpack.c.b16 %v137, %v135
    %v156 = vpack.c.b16 %v138, %v136
    %v157 = vpack.c.b16 %v141, %v139
    %v158 = vpack.c.b16 %v142, %v140
    %175 = vmatprep.subr.bf16.mxu0 %v144
    %176 = vmatpush1.bf16.msra.mxu0 %v143
    %177 = vmatprep.subr.bf16.mxu0 %v146
    %178 = vmatpush1.bf16.msra.mxu0 %v145
    %179 = vmatprep.subr.bf16.mxu0 %v148
    %180 = vmatpush1.bf16.msra.mxu0 %v147
    %181 = vmatprep.subr.bf16.mxu0 %v150
    %182 = vmatpush1.bf16.msra.mxu0 %v149
    %183 = vmatprep.subr.bf16.mxu0 %v152
    %184 = vmatpush1.bf16.msra.mxu0 %v151
    %185 = vmatprep.subr.bf16.mxu0 %v154
    %186 = vmatpush1.bf16.msra.mxu0 %v153
    %187 = vmatprep.subr.bf16.mxu0 %v156
    %188 = vmatpush1.bf16.msra.mxu0 %v155
    %189 = vmatprep.subr.bf16.mxu0 %v158
    %190 = vmatpush1.bf16.msra.mxu0 %v157
    %191 = vmatprep.subr.bf16.mxu0 0
    %192 = vmatpush1.bf16.msra.mxu0 0
    %193 = vmatprep.subr.bf16.mxu0 0
    %194 = vmatpush1.bf16.msra.mxu0 0
    %195 = vmatprep.subr.bf16.mxu0 0
    %196 = vmatpush1.bf16.msra.mxu0 0
    %197 = vmatprep.subr.bf16.mxu0 0
    %198 = vmatpush1.bf16.msra.mxu0 0
    %199 = vmatprep.subr.bf16.mxu0 0
    %200 = vmatpush1.bf16.msra.mxu0 0
    %201 = vmatprep.subr.bf16.mxu0 0
    %202 = vmatpush1.bf16.msra.mxu0 0
    %203 = vmatprep.subr.bf16.mxu0 0
    %204 = vmatpush1.bf16.msra.mxu0 0
    %205 = vmatprep.subr.bf16.mxu0 0
    %206 = vmatpush1.bf16.msra.mxu0 0
    %207 = vmatprep.mubr.bf16.mxu0 0
    %208 = vmatmul.mubr.bf16.gmra.mrb[0].mxu0 %v66
    %v209 = vpop.f32.mrb[0].mxu0
    %v210 = vadd.f32 %v88, %v209
    %v211 = vpop.f32.mrb[0].mxu0
    %v212 = vadd.f32 %v92, %v211
    %v213 = vpop.f32.mrb[0].mxu0
    %v214 = vpop.f32.mrb[0].mxu0
    %215 = vdwg.mxu0
    %v216 = vmax.f32 %v210, 0.0
    %v217 = vmax.f32 %v212, 0.0
    %v218 = vpack.c.bf16 %v216, %v216
    %v219 = vpack.c.bf16 %v217, %v217
    %v220 = vld [vmem:[#allocation2] sm:$0xff]
    %v221 = vld [vmem:[#allocation8] sm:$0xf]
    %v222 = vld [vmem:[#allocation8 + $0x4] sm:$0xf]
    %v223 = vld [vmem:[#allocation8 + $0x8] sm:$0xf]
    %v224 = vld [vmem:[#allocation8 + $0xc] sm:$0xf]
    %v225 = vld [vmem:[#allocation8 + $0x10] sm:$0xf]
    %v226 = vld [vmem:[#allocation8 + $0x14] sm:$0xf]
    %v227 = vld [vmem:[#allocation8 + $0x18] sm:$0xf]
    %v228 = vld [vmem:[#allocation8 + $0x1c] sm:$0xf]
    %v229 = vld [vmem:[#allocation8 + $0x20] sm:$0xf]
    %v230 = vld [vmem:[#allocation8 + $0x24] sm:$0xf]
    %v231 = vld [vmem:[#allocation8 + $0x28] sm:$0xf]
    %v232 = vld [vmem:[#allocation8 + $0x2c] sm:$0xf]
    %v233 = vld [vmem:[#allocation8 + $0x30] sm:$0xf]
    %v234 = vld [vmem:[#allocation8 + $0x34] sm:$0xf]
    %v235 = vld [vmem:[#allocation8 + $0x38] sm:$0xf]
    %v236 = vld [vmem:[#allocation8 + $0x3c] sm:$0xf]
    %v237 = vld [vmem:[#allocation8 + $0x40] sm:$0xf]
    %v238 = vld [vmem:[#allocation8 + $0x44] sm:$0xf]
    %v239 = vld [vmem:[#allocation8 + $0x48] sm:$0xf]
    %v240 = vld [vmem:[#allocation8 + $0x4c] sm:$0xf]
    %v241 = vld [vmem:[#allocation8 + $0x50] sm:$0xf]
    %v242 = vld [vmem:[#allocation8 + $0x54] sm:$0xf]
    %v243 = vld [vmem:[#allocation8 + $0x58] sm:$0xf]
    %v244 = vld [vmem:[#allocation8 + $0x5c] sm:$0xf]
    %v245 = vld [vmem:[#allocation8 + $0x60] sm:$0xf]
    %v246 = vld [vmem:[#allocation8 + $0x64] sm:$0xf]
    %v247 = vld [vmem:[#allocation8 + $0x68] sm:$0xf]
    %v248 = vld [vmem:[#allocation8 + $0x6c] sm:$0xf]
    %v249 = vld [vmem:[#allocation8 + $0x70] sm:$0xf]
    %v250 = vld [vmem:[#allocation8 + $0x74] sm:$0xf]
    %v251 = vld [vmem:[#allocation8 + $0x78] sm:$0xf]
    %v252 = vld [vmem:[#allocation8 + $0x7c] sm:$0xf]
    %v285 = vunpack.c.l.b16 %v221
    %v286 = vunpack.c.l.b16 %v222
    %v287 = vunpack.c.l.b16 %v223
    %v288 = vunpack.c.l.b16 %v224
    %v289 = vunpack.c.l.b16 %v225
    %v290 = vunpack.c.l.b16 %v226
    %v291 = vunpack.c.l.b16 %v227
    %v292 = vunpack.c.l.b16 %v228
    %v293 = vunpack.c.l.b16 %v229
    %v294 = vunpack.c.l.b16 %v230
    %v295 = vunpack.c.l.b16 %v231
    %v296 = vunpack.c.l.b16 %v232
    %v297 = vunpack.c.l.b16 %v233
    %v298 = vunpack.c.l.b16 %v234
    %v299 = vunpack.c.l.b16 %v235
    %v300 = vunpack.c.l.b16 %v236
    %v301 = vunpack.c.l.b16 %v237
    %v302 = vunpack.c.l.b16 %v238
    %v303 = vunpack.c.l.b16 %v239
    %v304 = vunpack.c.l.b16 %v240
    %v305 = vunpack.c.l.b16 %v241
    %v306 = vunpack.c.l.b16 %v242
    %v307 = vunpack.c.l.b16 %v243
    %v308 = vunpack.c.l.b16 %v244
    %v309 = vunpack.c.l.b16 %v245
    %v310 = vunpack.c.l.b16 %v246
    %v311 = vunpack.c.l.b16 %v247
    %v312 = vunpack.c.l.b16 %v248
    %v313 = vunpack.c.l.b16 %v249
    %v314 = vunpack.c.l.b16 %v250
    %v315 = vunpack.c.l.b16 %v251
    %v316 = vunpack.c.l.b16 %v252
    %v317 = vpack.c.b16 %v286, %v285
    %v318 = vpack.c.b16 %v288, %v287
    %v319 = vpack.c.b16 %v290, %v289
    %v320 = vpack.c.b16 %v292, %v291
    %v321 = vpack.c.b16 %v294, %v293
    %v322 = vpack.c.b16 %v296, %v295
    %v323 = vpack.c.b16 %v298, %v297
    %v324 = vpack.c.b16 %v300, %v299
    %v325 = vpack.c.b16 %v302, %v301
    %v326 = vpack.c.b16 %v304, %v303
    %v327 = vpack.c.b16 %v306, %v305
    %v328 = vpack.c.b16 %v308, %v307
    %v329 = vpack.c.b16 %v310, %v309
    %v330 = vpack.c.b16 %v312, %v311
    %v331 = vpack.c.b16 %v314, %v313
    %v332 = vpack.c.b16 %v316, %v315
    %349 = vmatprep.subr.bf16.mxu0 0
    %350 = vmatpush1.bf16.msra.mxu0 %v317
    %351 = vmatprep.subr.bf16.mxu0 0
    %352 = vmatpush1.bf16.msra.mxu0 %v318
    %353 = vmatprep.subr.bf16.mxu0 0
    %354 = vmatpush1.bf16.msra.mxu0 %v319
    %355 = vmatprep.subr.bf16.mxu0 0
    %356 = vmatpush1.bf16.msra.mxu0 %v320
    %357 = vmatprep.subr.bf16.mxu0 0
    %358 = vmatpush1.bf16.msra.mxu0 %v321
    %359 = vmatprep.subr.bf16.mxu0 0
    %360 = vmatpush1.bf16.msra.mxu0 %v322
    %361 = vmatprep.subr.bf16.mxu0 0
    %362 = vmatpush1.bf16.msra.mxu0 %v323
    %363 = vmatprep.subr.bf16.mxu0 0
    %364 = vmatpush1.bf16.msra.mxu0 %v324
    %365 = vmatprep.subr.bf16.mxu0 0
    %366 = vmatpush1.bf16.msra.mxu0 %v325
    %367 = vmatprep.subr.bf16.mxu0 0
    %368 = vmatpush1.bf16.msra.mxu0 %v326
    %369 = vmatprep.subr.bf16.mxu0 0
    %370 = vmatpush1.bf16.msra.mxu0 %v327
    %371 = vmatprep.subr.bf16.mxu0 0
    %372 = vmatpush1.bf16.msra.mxu0 %v328
    %373 = vmatprep.subr.bf16.mxu0 0
    %374 = vmatpush1.bf16.msra.mxu0 %v329
    %375 = vmatprep.subr.bf16.mxu0 0
    %376 = vmatpush1.bf16.msra.mxu0 %v330
    %377 = vmatprep.subr.bf16.mxu0 0
    %378 = vmatpush1.bf16.msra.mxu0 %v331
    %379 = vmatprep.subr.bf16.mxu0 0
    %380 = vmatpush1.bf16.msra.mxu0 %v332
    %381 = vmatprep.mubr.bf16.mxu0 %v219
    %382 = vmatmul.mubr.bf16.gmra.mrb[0].mxu0 %v218
    %v383 = vpop.f32.mrb[0].mxu0
    %v384 = vadd.f32 0.0, %v383
    %v385 = vpop.f32.mrb[0].mxu0
    %v386 = vpop.f32.mrb[0].mxu0
    %v387 = vpop.f32.mrb[0].mxu0
    %388 = vdwg.mxu0
    %v389 = vadd.f32 %v220, %v384
    %390 = vst [vmem:[#allocation2] sm:$0xff] %v389
    // Predicated region
    $region38: #{tpu_custom_call.1} parent=1 // pred_check
      %p391 = pneg %p61
    $region39: #{tpu_custom_call.1} parent=1 // pred_check_branch
      %393 = sbr.rel (%p391) target = $region41
    $region40: #{tpu_custom_call.1} parent=1 // pred_region
      %v394 = vld [vmem:[#allocation2] sm:$0xff]
      %v395 = vld [vmem:[%s4] sm:$0x1]
      %v397 = vlaneseq
      %v398 = vshrl.u32 %v397, 7
      %v399 = vsub.s32 0, %v398
      %v400 = vrot.slane %v395, %v399
      %v402 = vadd.f32 %v394, %v400
      %403 = vst [vmem:[#allocation9] sm:$0xff] %v402
    $region41: #{tpu_custom_call.1} parent=1 // pred_fallthru
      _
    // Predicated region
    $region42: #{tpu_custom_call.1} parent=1 // pred_check
      _
    $region43: #{tpu_custom_call.1} parent=1 // pred_check_branch
      %405 = sbr.rel (0) target = $region45
    $region44: #{tpu_custom_call.1} parent=1 // pred_region
      %s407 = ssub.s32 128, 128
      %408 = vsyncadd [#allocation5], %s407
      %s410 = sshll.u32 [#allocation9], 4
      %s411 = int_to_ptr.vmem [resolvable:$true] %s410
      %413 = dma.vmem_to_hbm [thread:$0]  %s411, 128, %s5, [#allocation5]
    $region45: #{tpu_custom_call.1} parent=1 // pred_fallthru
      _
    // Predicated region
    $region46: #{tpu_custom_call.1} parent=1 // pred_check
      _
    $region47: #{tpu_custom_call.1} parent=1 // pred_check_branch
      %415 = sbr.rel (0) target = $region49
    $region48: #{tpu_custom_call.1} parent=1 // pred_region
      %416 = dma.done [#allocation5], 128
    $region49: #{tpu_custom_call.1} parent=1 // pred_fallthru
      _
    %417 = vsyncpa [#allocation4], 1
    %418 = vsyncpa [#allocation7], 1
    %419 = vsyncpa [#allocation5], 1

</llo_original>
